<compile_context>
chip_gen: v5e
topology: v5e:2x2
jax: 0.10.0
libtpu: 0.0.40
codegen_flags: <defaults>
</compile_context>

<pallas_src>
import jax
import jax.numpy as jnp
from jax.experimental import pallas as pl
from jax.experimental.pallas import tpu as pltpu


# ---------------------------------------------------------------------------
# Kernel
# ---------------------------------------------------------------------------
def _attacker_score_kernel(vf_ref, tw_ref, cw_ref, mask_ref, kv_ref, mt_ref,
                           score_ref, amax_ref):
    bb, T, C, E = cw_ref.shape
    f32 = jnp.float32

    # Visual projection, folded through w_tw:  v_proj = vf @ (w_v @ w_tw.T)
    vf = vf_ref[...][:, 0, :]                                        # (bb, F)
    v_proj = jnp.dot(vf, kv_ref[...], preferred_element_type=f32)    # (bb, E)

    tw = tw_ref[...]                                                 # (bb, T, E)

    # word_importance = softmax_T( <tw, v_proj> ), kept on a (bb, T) lane layout.
    wi_logits = jnp.sum(tw.astype(f32) * v_proj[:, None, :], axis=-1)        # (bb, T)
    wi_max = jnp.max(wi_logits, axis=-1, keepdims=True)
    wi_exp = jnp.exp(wi_logits - wi_max)
    wi = wi_exp * pl.reciprocal(jnp.sum(wi_exp, axis=-1, keepdims=True),
                                approx=True)                                 # (bb, T)

    # Target-word projection folded through w_cw:  t_proj = tw @ (w_tw @ w_cw.T)
    t_proj = jnp.dot(tw.reshape(bb * T, E), mt_ref[...],
                     preferred_element_type=f32).reshape(bb, T, E)

    # substitution_impact = softmax_C( <cw, t_proj> )  (no (bb,T,C,H) intermediate).
    cw = cw_ref[...].astype(f32)                                     # (bb, T, C, E)
    sub_logits = jnp.sum(cw * t_proj[:, :, None, :], axis=-1)        # (bb, T, C)
    sub_max = jnp.max(sub_logits, axis=-1, keepdims=True)
    sub_exp = jnp.exp(sub_logits - sub_max)
    sub = sub_exp * pl.reciprocal(jnp.sum(sub_exp, axis=-1, keepdims=True),
                                  approx=True)                       # (bb, T, C)

    # attack_score = word_importance.unsqueeze(2) * substitution_impact, then
    # masked_fill_(perturb_mask, -inf).
    attack = wi[:, :, None] * sub                                    # (bb, T, C)
    masked = jnp.where(mask_ref[...] != 0, -jnp.inf, attack)
    # NOTE: output kept (bb, T, C) (output bytes are 1/E of the input bytes, so
    # the partial-store cost is negligible) to avoid an in-kernel lane-changing
    # reshape; the wrapper flattens to (B, T*C) for free.
    score_ref[...] = masked

    # Fused argmax head over the flattened (T*C) axis (first max index, like torch).
    row_max = jnp.max(jnp.max(masked, axis=2, keepdims=True), axis=1, keepdims=True)
    t_idx = jax.lax.broadcasted_iota(jnp.int32, (bb, T, C), 1)
    c_idx = jax.lax.broadcasted_iota(jnp.int32, (bb, T, C), 2)
    flat_idx = (t_idx * C + c_idx).astype(f32)
    cand = jnp.where(masked == row_max, flat_idx, float(T * C))
    amax = jnp.min(jnp.min(cand, axis=2, keepdims=True), axis=1, keepdims=True)
    amax_ref[...] = amax.astype(jnp.int32)                           # (bb, 1, 1)


# ---------------------------------------------------------------------------
# Wrappers
# ---------------------------------------------------------------------------
def _pick_block_b(B, T, C, E, F, itemsize, budget_bytes=8 << 20):
    """Largest batch tile (divisor of B) whose double-buffered per-step working
    set fits a conservative VMEM budget (safe on v5e 16 MiB scoped / v7x 64 MiB)."""
    per_row = (T * C * E * itemsize      # candidate_word_feature (dominant)
               + T * E * itemsize        # target_word_feature
               + F * itemsize            # visual_feature
               + T * C * 4               # mask (int32)
               + T * C * 4 + 4)          # score (f32) + argmax (int32)
    for bb in (64, 32, 16, 8, 4, 2, 1):
        if B % bb == 0 and 2 * bb * per_row <= budget_bytes:
            return bb
    return 1


def attacker_scores(visual_feature, target_word_feature, candidate_word_feature,
                    perturb_mask, w_v, w_tw, w_cw, *,
                    compute_dtype=jnp.float32, block_b=None):
    """Returns (attack_score_final (B, T*C) f32, fused argmax indices (B,) int32)."""
    B, F = visual_feature.shape
    _, T, E = target_word_feature.shape
    C = candidate_word_feature.shape[2]

    # Fold the bilinear forms once (tiny (F,E)/(E,E) matmuls, computed in f32).
    kv = (w_v @ w_tw.T).astype(compute_dtype)            # (F, E)
    mt = (w_tw @ w_cw.T).astype(compute_dtype)           # (E, E)

    vf3 = visual_feature.reshape(B, 1, F).astype(compute_dtype)
    tw = target_word_feature.astype(compute_dtype)
    cw = candidate_word_feature.astype(compute_dtype)
    mask3 = perturb_mask.reshape(B, T, C).astype(jnp.int32)

    if block_b is None or block_b <= 0 or B % block_b != 0:
        block_b = _pick_block_b(B, T, C, E, F, jnp.dtype(compute_dtype).itemsize)
    grid = (B // block_b,)

    scores3, amax3 = pl.pallas_call(
        _attacker_score_kernel,
        out_shape=(jax.ShapeDtypeStruct((B, T, C), jnp.float32),
                   jax.ShapeDtypeStruct((B, 1, 1), jnp.int32)),
        grid_spec=pltpu.PrefetchScalarGridSpec(
            num_scalar_prefetch=0,
            grid=grid,
            in_specs=[
                pl.BlockSpec((block_b, 1, F), lambda i: (i, 0, 0)),
                pl.BlockSpec((block_b, T, E), lambda i: (i, 0, 0)),
                pl.BlockSpec((block_b, T, C, E), lambda i: (i, 0, 0, 0)),
                pl.BlockSpec((block_b, T, C), lambda i: (i, 0, 0)),
                # Folded weights: same block index every step -> DMA'd once.
                pl.BlockSpec((F, E), lambda i: (0, 0)),
                pl.BlockSpec((E, E), lambda i: (0, 0)),
            ],
            out_specs=(
                pl.BlockSpec((block_b, T, C), lambda i: (i, 0, 0)),
                pl.BlockSpec((block_b, 1, 1), lambda i: (i, 0, 0)),
            ),
        ),
        compiler_params=pltpu.CompilerParams(
            # Batch blocks are independent -> sharded across v7x's two TensorCores.
            dimension_semantics=("parallel",),
            vmem_limit_bytes=32 * 1024 * 1024,
        ),
    )(vf3, tw, cw, mask3, kv, mt)

    return scores3.reshape(B, T * C), amax3.reshape(B)


def attacker_forward(feedback_attacker, ctx, visual_feature, target_word_feature,
                     candidate_word_feature, perturb_mask,
                     target_word_position, candidate_word_position,
                     w_v, w_tw, w_cw, max_cw_number, rng_key=None,
                     compute_dtype=jnp.float32, block_b=None):
    """Full forward: Pallas kernel for the scores + JAX glue for the head & ctx edit."""
    B, L, _ = ctx.shape

    attack_score_final, a_t_argmax = attacker_scores(
        visual_feature, target_word_feature, candidate_word_feature,
        perturb_mask, w_v, w_tw, w_cw,
        compute_dtype=compute_dtype, block_b=block_b)            # (B, T*C), (B,)

    if feedback_attacker == 'sample':
        # TODO(synk): RNG stream differs from torch.distributions.Categorical;
        # semantics (sampling from softmax of the masked scores) match.
        # NOTE: a row with every candidate masked yields NaNs here (same as torch).
        a_t = jax.random.categorical(rng_key, attack_score_final, axis=1)
        logp = jax.nn.log_softmax(attack_score_final, axis=1)
        probs = jnp.exp(logp)
        entropy = -jnp.sum(jnp.where(probs > 0, probs * logp, 0.0), axis=1)
        policy_log_probs = jnp.take_along_axis(logp, a_t[:, None], axis=1)[:, 0]
    elif feedback_attacker == 'argmax':
        a_t = a_t_argmax                        # fused in-kernel argmax
        entropy = None
        policy_log_probs = None
    else:
        raise ValueError('Invalid feedback option: %s' % feedback_attacker)

    sub_target_word_ind = a_t // max_cw_number
    sub_candidate_word_ind = a_t % max_cw_number

    # ctx word substitution, fully vectorized (one batched gather + scatter).
    # TODO(synk): original branches on args.pretrain_attacker / args.adv_train and
    # reads perm_obs dicts; here the position tables are passed in as arrays.
    batch_idx = jnp.arange(B)
    tpos = target_word_position[batch_idx, sub_target_word_ind]                 # (B,)
    cpos = candidate_word_position[batch_idx, sub_target_word_ind,
                                   sub_candidate_word_ind]                      # (B,)
    valid = jnp.logical_and(tpos < L - 1, cpos < L - 1)
    new_rows = jnp.where(valid[:, None], ctx[batch_idx, cpos], ctx[batch_idx, tpos])
    perturbed_ctx = ctx.at[batch_idx, tpos].set(new_rows)

    return (attack_score_final, perturbed_ctx, sub_target_word_ind,
            entropy, policy_log_probs)


# ---------------------------------------------------------------------------
# Pure-JAX references for the correctness checks
# ---------------------------------------------------------------------------
def _reference_scores_original(vf, tw, cw, mask, w_v, w_tw, w_cw):
    """Faithful (unfolded, f32) transcription of the torch module's score path."""
    B, T, C, E = cw.shape
    v_h = vf @ w_v                                            # (B, H)
    t_h = jnp.einsum('bte,eh->bth', tw, w_tw)                 # (B, T, H)
    wi = jax.nn.softmax(jnp.einsum('bth,bh->bt', t_h, v_h), axis=1)
    c_h = jnp.einsum('btce,eh->btch', cw, w_cw)               # (B, T, C, H)
    sub = jax.nn.softmax(jnp.einsum('btch,bth->btc', c_h, t_h), axis=-1)
    flat = (wi[:, :, None] * sub).reshape(B, T * C)
    return jnp.where(mask != 0, -jnp.inf, flat)


def _reference_scores_folded(vf, tw, cw, mask, w_v, w_tw, w_cw, compute_dtype):
    """Mirror of the kernel's folded math + dtype casts (tight numeric comparison)."""
    B, T, C, E = cw.shape
    f32 = jnp.float32
    kv = (w_v @ w_tw.T).astype(compute_dtype)
    mt = (w_tw @ w_cw.T).astype(compute_dtype)
    vf_c, tw_c, cw_c = (x.astype(compute_dtype) for x in (vf, tw, cw))
    v_proj = jnp.dot(vf_c, kv, preferred_element_type=f32)                     # (B, E)
    wi = jax.nn.softmax(jnp.sum(tw_c.astype(f32) * v_proj[:, None, :], -1), -1)
    t_proj = jnp.einsum('bte,ef->btf', tw_c, mt, preferred_element_type=f32)   # (B, T, E)
    sub = jax.nn.softmax(jnp.sum(cw_c.astype(f32) * t_proj[:, :, None, :], -1), -1)
    flat = (wi[:, :, None] * sub).reshape(B, T * C)
    return jnp.where(mask != 0, -jnp.inf, flat)


# ---------------------------------------------------------------------------
# Self-test
# ---------------------------------------------------------------------------
if __name__ == "__main__":
    B, F, E, H, T, C, L, D = 8, 32, 32, 32, 4, 8, 16, 32
    key = jax.random.PRNGKey(0)
    ks = jax.random.split(key, 12)

    visual_feature = jax.random.normal(ks[0], (B, F), jnp.float32)
    target_word_feature = jax.random.normal(ks[1], (B, T, E), jnp.float32)
    candidate_word_feature = jax.random.normal(ks[2], (B, T, C, E), jnp.float32)
    ctx = jax.random.normal(ks[3], (B, L, D), jnp.float32)
    perturb_mask = (jax.random.uniform(ks[4], (B, T * C)) < 0.25).astype(jnp.int32)
    perturb_mask = perturb_mask.at[:, 0].set(0)   # guarantee >=1 unmasked per row

    # Synthetic parameters (shapes per nn.Linear(feature, hidden, bias=False), transposed).
    w_v = jax.random.normal(ks[5], (F, H), jnp.float32) / jnp.sqrt(F)
    w_tw = jax.random.normal(ks[6], (E, H), jnp.float32) / jnp.sqrt(E)
    w_cw = jax.random.normal(ks[7], (E, H), jnp.float32) / jnp.sqrt(E)

    # Synthetic word-position tables (stand-ins for perm_obs[...]['*_word_position']).
    target_word_position = jax.random.randint(ks[8], (B, T), 0, L)
    candidate_word_position = jax.random.randint(ks[9], (B, T, C), 0, L)

    unmasked = perturb_mask == 0

    # ---- f32 path: multi-step grid (block_b=2 -> grid=(4,)) + fused argmax ----
    scores_f32, a_t_f32 = attacker_scores(
        visual_feature, target_word_feature, candidate_word_feature, perturb_mask,
        w_v, w_tw, w_cw, compute_dtype=jnp.float32, block_b=2)
    jax.block_until_ready((scores_f32, a_t_f32))

    ref = _reference_scores_original(visual_feature, target_word_feature,
                                     candidate_word_feature, perturb_mask,
                                     w_v, w_tw, w_cw)
    assert jnp.allclose(jnp.where(unmasked, scores_f32, 0.0),
                        jnp.where(unmasked, ref, 0.0),
                        atol=2e-2, rtol=2e-2), "f32 kernel mismatch vs reference"
    assert bool(jnp.all(jnp.where(unmasked, True, jnp.isneginf(scores_f32)))), \
        "perturb mask not applied"
    assert bool(jnp.all(a_t_f32 == jnp.argmax(scores_f32, axis=1))), \
        "fused argmax mismatch"

    # ---- bf16 inputs / f32 accumulation path ----
    scores_bf16, _ = attacker_scores(
        visual_feature, target_word_feature, candidate_word_feature, perturb_mask,
        w_v, w_tw, w_cw, compute_dtype=jnp.bfloat16, block_b=2)
    jax.block_until_ready(scores_bf16)
    ref_bf16 = _reference_scores_folded(visual_feature, target_word_feature,
                                        candidate_word_feature, perturb_mask,
                                        w_v, w_tw, w_cw, jnp.bfloat16)
    assert jnp.allclose(jnp.where(unmasked, scores_bf16, 0.0),
                        jnp.where(unmasked, ref_bf16, 0.0),
                        atol=2e-2, rtol=2e-2), "bf16 kernel mismatch vs reference"
    assert bool(jnp.all(jnp.where(unmasked, True, jnp.isneginf(scores_bf16)))), \
        "perturb mask not applied (bf16)"

    # ---- full forward, argmax feedback ----
    (scores, perturbed_ctx, sub_t_ind, entropy, policy_log_probs) = attacker_forward(
        'argmax', ctx, visual_feature, target_word_feature, candidate_word_feature,
        perturb_mask, target_word_position, candidate_word_position,
        w_v, w_tw, w_cw, max_cw_number=C, compute_dtype=jnp.float32, block_b=2)
    jax.block_until_ready((scores, perturbed_ctx, sub_t_ind))

    # Check the vectorized ctx substitution against the original per-batch loop.
    a_t = jnp.argmax(scores, axis=1)
    sub_c_ind = a_t % C
    assert bool(jnp.all(sub_t_ind == a_t // C)), "target word index mismatch"
    exp_ctx = ctx
    for b in range(B):
        tpos = int(target_word_position[b, int(sub_t_ind[b])])
        cpos = int(candidate_word_position[b, int(sub_t_ind[b]), int(sub_c_ind[b])])
        if tpos < L - 1 and cpos < L - 1:
            exp_ctx = exp_ctx.at[b, tpos].set(ctx[b, cpos])
    assert jnp.allclose(perturbed_ctx, exp_ctx), "ctx substitution mismatch"

    # ---- full forward, sample feedback ----
    (scores_s, perturbed_ctx_s, sub_t_ind_s, entropy_s, logp_s) = attacker_forward(
        'sample', ctx, visual_feature, target_word_feature, candidate_word_feature,
        perturb_mask, target_word_position, candidate_word_position,
        w_v, w_tw, w_cw, max_cw_number=C, rng_key=ks[10],
        compute_dtype=jnp.float32, block_b=2)
    jax.block_until_ready((scores_s, perturbed_ctx_s, sub_t_ind_s, entropy_s, logp_s))
    assert bool(jnp.all(jnp.isfinite(entropy_s))), "non-finite entropy"
    assert bool(jnp.all(jnp.isfinite(logp_s))), "non-finite policy log prob"

    print("KERNEL_OK")
</pallas_src>

<mosaic_0001>
module attributes {stable_mosaic.version = 11 : i64} {
  func.func @_attacker_score_kernel(%arg0: i32, %arg1: memref<2x1x32xf32, #tpu.memory_space<vmem>>, %arg2: memref<2x4x32xf32, #tpu.memory_space<vmem>>, %arg3: memref<2x4x8x32xf32, #tpu.memory_space<vmem>>, %arg4: memref<2x4x8xi32, #tpu.memory_space<vmem>>, %arg5: memref<32x32xf32, #tpu.memory_space<vmem>>, %arg6: memref<32x32xf32, #tpu.memory_space<vmem>>, %arg7: memref<2x4x8xf32, #tpu.memory_space<vmem>>, %arg8: memref<2x1x1xi32, #tpu.memory_space<vmem>>) attributes {dimension_semantics = [#tpu.dimension_semantics<parallel>], iteration_bounds = array<i64: 4>, scalar_prefetch = 0 : i64, scratch_operands = 0 : i64, tpu.core_type = #tpu.core_type<tc>, window_params = [{transform_indices = @transform_0, window_bounds = array<i64: 2, 1, 32>}, {transform_indices = @transform_1, window_bounds = array<i64: 2, 4, 32>}, {transform_indices = @transform_2, window_bounds = array<i64: 2, 4, 8, 32>}, {transform_indices = @transform_3, window_bounds = array<i64: 2, 4, 8>}, {pipeline_mode = #tpu.pipeline_mode<synchronous>, transform_indices = @transform_4, window_bounds = array<i64: 32, 32>}, {pipeline_mode = #tpu.pipeline_mode<synchronous>, transform_indices = @transform_5, window_bounds = array<i64: 32, 32>}, {transform_indices = @transform_6, window_bounds = array<i64: 2, 4, 8>}, {transform_indices = @transform_7, window_bounds = array<i64: 2, 1, 1>}]} {
    %c0 = arith.constant 0 : index
    %c0_0 = arith.constant 0 : index
    %c0_1 = arith.constant 0 : index
    %0 = vector.load %arg1[%c0, %c0_0, %c0_1] : memref<2x1x32xf32, #tpu.memory_space<vmem>>, vector<2x1x32xf32>
    %1 = vector.shape_cast %0 : vector<2x1x32xf32> to vector<2x32xf32>
    %c0_2 = arith.constant 0 : index
    %c0_3 = arith.constant 0 : index
    %2 = vector.load %arg5[%c0_2, %c0_3] : memref<32x32xf32, #tpu.memory_space<vmem>>, vector<32x32xf32>
    %cst = arith.constant dense<0.000000e+00> : vector<2x32xf32>
    %3 = tpu.matmul %1, %2, %cst {dimension_numbers = #tpu.dot_dimension_numbers<[1], [0], [0], [1], [0, 0, 1, 1], [], []>} : vector<2x32xf32>, vector<32x32xf32>, vector<2x32xf32> -> vector<2x32xf32>
    %c0_4 = arith.constant 0 : index
    %c0_5 = arith.constant 0 : index
    %c0_6 = arith.constant 0 : index
    %4 = vector.load %arg2[%c0_4, %c0_5, %c0_6] : memref<2x4x32xf32, #tpu.memory_space<vmem>>, vector<2x4x32xf32>
    %5 = vector.shape_cast %3 : vector<2x32xf32> to vector<2x1x32xf32>
    %6 = vector.broadcast %5 : vector<2x1x32xf32> to vector<2x4x32xf32>
    %7 = arith.mulf %4, %6 : vector<2x4x32xf32>
    %cst_7 = arith.constant dense<0.000000e+00> : vector<2x4xf32>
    %8 = vector.multi_reduction <add>, %7, %cst_7 [2] : vector<2x4x32xf32> to vector<2x4xf32>
    %cst_8 = arith.constant dense<0xFF800000> : vector<2xf32>
    %9 = vector.multi_reduction <maximumf>, %8, %cst_8 [1] : vector<2x4xf32> to vector<2xf32>
    %10 = vector.shape_cast %9 : vector<2xf32> to vector<2x1xf32>
    %11 = vector.broadcast %10 : vector<2x1xf32> to vector<2x4xf32>
    %12 = arith.subf %8, %11 : vector<2x4xf32>
    %13 = math.exp %12 : vector<2x4xf32>
    %cst_9 = arith.constant dense<0.000000e+00> : vector<2xf32>
    %14 = vector.multi_reduction <add>, %13, %cst_9 [1] : vector<2x4xf32> to vector<2xf32>
    %15 = vector.shape_cast %14 : vector<2xf32> to vector<2x1xf32>
    %16 = tpu.reciprocal %15 {approx = true} : vector<2x1xf32> -> vector<2x1xf32>
    %17 = vector.broadcast %16 : vector<2x1xf32> to vector<2x4xf32>
    %18 = arith.mulf %13, %17 : vector<2x4xf32>
    %19 = vector.shape_cast %4 : vector<2x4x32xf32> to vector<8x32xf32>
    %c0_10 = arith.constant 0 : index
    %c0_11 = arith.constant 0 : index
    %20 = vector.load %arg6[%c0_10, %c0_11] : memref<32x32xf32, #tpu.memory_space<vmem>>, vector<32x32xf32>
    %cst_12 = arith.constant dense<0.000000e+00> : vector<8x32xf32>
    %21 = tpu.matmul %19, %20, %cst_12 {dimension_numbers = #tpu.dot_dimension_numbers<[1], [0], [0], [1], [0, 0, 1, 1], [], []>} : vector<8x32xf32>, vector<32x32xf32>, vector<8x32xf32> -> vector<8x32xf32>
    %22 = vector.shape_cast %21 : vector<8x32xf32> to vector<2x4x32xf32>
    %c0_13 = arith.constant 0 : index
    %c0_14 = arith.constant 0 : index
    %c0_15 = arith.constant 0 : index
    %c0_16 = arith.constant 0 : index
    %23 = vector.load %arg3[%c0_13, %c0_14, %c0_15, %c0_16] : memref<2x4x8x32xf32, #tpu.memory_space<vmem>>, vector<2x4x8x32xf32>
    %24 = vector.shape_cast %22 : vector<2x4x32xf32> to vector<2x4x1x32xf32>
    %25 = vector.broadcast %24 : vector<2x4x1x32xf32> to vector<2x4x8x32xf32>
    %26 = arith.mulf %23, %25 : vector<2x4x8x32xf32>
    %cst_17 = arith.constant dense<0.000000e+00> : vector<2x4x8xf32>
    %27 = vector.multi_reduction <add>, %26, %cst_17 [3] : vector<2x4x8x32xf32> to vector<2x4x8xf32>
    %cst_18 = arith.constant dense<0xFF800000> : vector<2x4xf32>
    %28 = vector.multi_reduction <maximumf>, %27, %cst_18 [2] : vector<2x4x8xf32> to vector<2x4xf32>
    %29 = vector.shape_cast %28 : vector<2x4xf32> to vector<2x4x1xf32>
    %30 = vector.broadcast %29 : vector<2x4x1xf32> to vector<2x4x8xf32>
    %31 = arith.subf %27, %30 : vector<2x4x8xf32>
    %32 = math.exp %31 : vector<2x4x8xf32>
    %cst_19 = arith.constant dense<0.000000e+00> : vector<2x4xf32>
    %33 = vector.multi_reduction <add>, %32, %cst_19 [2] : vector<2x4x8xf32> to vector<2x4xf32>
    %34 = vector.shape_cast %33 : vector<2x4xf32> to vector<2x4x1xf32>
    %35 = tpu.reciprocal %34 {approx = true} : vector<2x4x1xf32> -> vector<2x4x1xf32>
    %36 = vector.broadcast %35 : vector<2x4x1xf32> to vector<2x4x8xf32>
    %37 = arith.mulf %32, %36 : vector<2x4x8xf32>
    %38 = vector.shape_cast %18 : vector<2x4xf32> to vector<2x4x1xf32>
    %39 = vector.broadcast %38 : vector<2x4x1xf32> to vector<2x4x8xf32>
    %40 = arith.mulf %39, %37 : vector<2x4x8xf32>
    %c0_20 = arith.constant 0 : index
    %c0_21 = arith.constant 0 : index
    %c0_22 = arith.constant 0 : index
    %41 = vector.load %arg4[%c0_20, %c0_21, %c0_22] : memref<2x4x8xi32, #tpu.memory_space<vmem>>, vector<2x4x8xi32>
    %c0_i32 = arith.constant 0 : i32
    %42 = vector.broadcast %c0_i32 : i32 to vector<2x4x8xi32>
    %43 = arith.cmpi ne, %41, %42 : vector<2x4x8xi32>
    %cst_23 = arith.constant 0xFF800000 : f32
    %44 = vector.broadcast %cst_23 : f32 to vector<2x4x8xf32>
    %45 = arith.select %43, %44, %40 : vector<2x4x8xi1>, vector<2x4x8xf32>
    %c0_24 = arith.constant 0 : index
    %c0_25 = arith.constant 0 : index
    %c0_26 = arith.constant 0 : index
    %46 = vector.load %arg7[%c0_24, %c0_25, %c0_26] : memref<2x4x8xf32, #tpu.memory_space<vmem>>, vector<2x4x8xf32>
    tpu.vector_store %arg7[%c0_24, %c0_25, %c0_26], %45 {strides = array<i32>} : memref<2x4x8xf32, #tpu.memory_space<vmem>>, vector<2x4x8xf32>,
    %cst_27 = arith.constant dense<0xFF800000> : vector<2x4xf32>
    %47 = vector.multi_reduction <maximumf>, %45, %cst_27 [2] : vector<2x4x8xf32> to vector<2x4xf32>
    %48 = vector.shape_cast %47 : vector<2x4xf32> to vector<2x4x1xf32>
    %cst_28 = arith.constant dense<0xFF800000> : vector<2x1xf32>
    %49 = vector.multi_reduction <maximumf>, %48, %cst_28 [1] : vector<2x4x1xf32> to vector<2x1xf32>
    %50 = vector.shape_cast %49 : vector<2x1xf32> to vector<2x1x1xf32>
    %51 = tpu.iota {dimensions = array<i32: 1>} : vector<2x4x8xi32>
    %52 = tpu.iota {dimensions = array<i32: 2>} : vector<2x4x8xi32>
    %c8_i32 = arith.constant 8 : i32
    %53 = vector.broadcast %c8_i32 : i32 to vector<2x4x8xi32>
    %54 = arith.muli %51, %53 : vector<2x4x8xi32>
    %55 = arith.addi %54, %52 : vector<2x4x8xi32>
    %56 = arith.sitofp %55 : vector<2x4x8xi32> to vector<2x4x8xf32>
    %57 = vector.broadcast %50 : vector<2x1x1xf32> to vector<2x4x8xf32>
    %58 = arith.cmpf oeq, %45, %57 : vector<2x4x8xf32>
    %cst_29 = arith.constant 3.200000e+01 : f32
    %59 = vector.broadcast %cst_29 : f32 to vector<2x4x8xf32>
    %60 = arith.select %58, %56, %59 : vector<2x4x8xi1>, vector<2x4x8xf32>
    %cst_30 = arith.constant dense<0x7F800000> : vector<2x4xf32>
    %61 = vector.multi_reduction <minimumf>, %60, %cst_30 [2] : vector<2x4x8xf32> to vector<2x4xf32>
    %62 = vector.shape_cast %61 : vector<2x4xf32> to vector<2x4x1xf32>
    %cst_31 = arith.constant dense<0x7F800000> : vector<2x1xf32>
    %63 = vector.multi_reduction <minimumf>, %62, %cst_31 [1] : vector<2x4x1xf32> to vector<2x1xf32>
    %64 = vector.shape_cast %63 : vector<2x1xf32> to vector<2x1x1xf32>
    %65 = arith.fptosi %64 : vector<2x1x1xf32> to vector<2x1x1xi32>
    %c0_32 = arith.constant 0 : index
    %c0_33 = arith.constant 0 : index
    %c0_34 = arith.constant 0 : index
    %66 = vector.load %arg8[%c0_32, %c0_33, %c0_34] : memref<2x1x1xi32, #tpu.memory_space<vmem>>, vector<2x1x1xi32>
    tpu.vector_store %arg8[%c0_32, %c0_33, %c0_34], %65 {strides = array<i32>} : memref<2x1x1xi32, #tpu.memory_space<vmem>>, vector<2x1x1xi32>,
    return
  }
  func.func @transform_0(%arg0: i32) -> (i32, i32, i32) {
    %c0_i32 = arith.constant 0 : i32
    %c0_i32_0 = arith.constant 0 : i32
    %c0_i32_1 = arith.constant 0 : i32
    return %arg0, %c0_i32, %c0_i32_0 : i32, i32, i32
  }
  func.func @transform_1(%arg0: i32) -> (i32, i32, i32) {
    %c0_i32 = arith.constant 0 : i32
    %c0_i32_0 = arith.constant 0 : i32
    %c0_i32_1 = arith.constant 0 : i32
    return %arg0, %c0_i32, %c0_i32_0 : i32, i32, i32
  }
  func.func @transform_2(%arg0: i32) -> (i32, i32, i32, i32) {
    %c0_i32 = arith.constant 0 : i32
    %c0_i32_0 = arith.constant 0 : i32
    %c0_i32_1 = arith.constant 0 : i32
    %c0_i32_2 = arith.constant 0 : i32
    return %arg0, %c0_i32, %c0_i32_0, %c0_i32_1 : i32, i32, i32, i32
  }
  func.func @transform_3(%arg0: i32) -> (i32, i32, i32) {
    %c0_i32 = arith.constant 0 : i32
    %c0_i32_0 = arith.constant 0 : i32
    %c0_i32_1 = arith.constant 0 : i32
    return %arg0, %c0_i32, %c0_i32_0 : i32, i32, i32
  }
  func.func @transform_4(%arg0: i32) -> (i32, i32) {
    %c0_i32 = arith.constant 0 : i32
    %c0_i32_0 = arith.constant 0 : i32
    %c0_i32_1 = arith.constant 0 : i32
    return %c0_i32, %c0_i32_0 : i32, i32
  }
  func.func @transform_5(%arg0: i32) -> (i32, i32) {
    %c0_i32 = arith.constant 0 : i32
    %c0_i32_0 = arith.constant 0 : i32
    %c0_i32_1 = arith.constant 0 : i32
    return %c0_i32, %c0_i32_0 : i32, i32
  }
  func.func @transform_6(%arg0: i32) -> (i32, i32, i32) {
    %c0_i32 = arith.constant 0 : i32
    %c0_i32_0 = arith.constant 0 : i32
    %c0_i32_1 = arith.constant 0 : i32
    return %arg0, %c0_i32, %c0_i32_0 : i32, i32, i32
  }
  func.func @transform_7(%arg0: i32) -> (i32, i32, i32) {
    %c0_i32 = arith.constant 0 : i32
    %c0_i32_0 = arith.constant 0 : i32
    %c0_i32_1 = arith.constant 0 : i32
    return %arg0, %c0_i32, %c0_i32_0 : i32, i32, i32
  }
}

</mosaic_0001>

<llo_original>
// kernel: tpu_custom_call.1
$region0: #{tpu_custom_call.1}
  #allocation0 [shape = 'u32[]', space=smem, size = 0x4, offset = 0x4, fixed_abs, tag = 'smem constant byte address 0x4 - core index']
  #allocation1 [shape = 'u32[72,128]{1,0:T(1,128)}', space=vmem, size = 0x9000, scoped, tag = 'internal scratch']
  %s0 = inlined_call_operand.hbm [shape: f32[8,1,32], index: 0, kind: input, shape index: {}]
  %s1 = inlined_call_operand.hbm [shape: f32[8,4,32], index: 1, kind: input, shape index: {}]
  %s2 = inlined_call_operand.hbm [shape: f32[8,4,8,32], index: 2, kind: input, shape index: {}]
  %s3 = inlined_call_operand.hbm [shape: s32[8,4,8], index: 3, kind: input, shape index: {}]
  %s4 = inlined_call_operand.hbm [shape: f32[32,32], index: 4, kind: input, shape index: {}]
  %s5 = inlined_call_operand.hbm [shape: f32[32,32], index: 5, kind: input, shape index: {}]
  %s6 = inlined_call_operand.hbm [shape: f32[8,4,8], index: 6, kind: output, shape index: {0}]
  %s7 = inlined_call_operand.vmem [shape: s32[8,1,1], index: 7, kind: output, shape index: {1}]
  %8 = xla_tuple %s6, %s7
  %s9 = sld [smem:[#allocation0]]
  $region89: #{tpu_custom_call.1} parent=0
    _
  %s11 = ssub.s32 1, %s9
  %s12 = scalar_select 0, %s11, %s9
  $region1: #{tpu_custom_call.1} parent=0
    #allocation2 [shape = 'u8[2048]{0}', space=vmem, size = 0x800, scoped, tag = 'input window, operand 0']
    #allocation3 [shape = 's32[2]{0}', space=sflag, size = 0x8, scoped, tag = 'scoped memory for tpu_custom_call.1']
    #allocation4 [shape = 's32[2]{0}', space=sflag, size = 0x8, scoped, tag = 'scoped memory for tpu_custom_call.1']
    #allocation5 [shape = 'u8[8192]{0}', space=vmem, size = 0x2000, scoped, tag = 'input window, operand 1']
    #allocation6 [shape = 's32[2]{0}', space=sflag, size = 0x8, scoped, tag = 'scoped memory for tpu_custom_call.1']
    #allocation7 [shape = 'u8[65536]{0}', space=vmem, size = 0x10000, scoped, tag = 'input window, operand 2']
    #allocation8 [shape = 'u8[8192]{0}', space=vmem, size = 0x2000, scoped, tag = 'input window, operand 3']
    #allocation9 [shape = 's32[2]{0}', space=sflag, size = 0x8, scoped, tag = 'scoped memory for tpu_custom_call.1']
    #allocation10 [shape = 'u8[16384]{0}', space=vmem, size = 0x4000, scoped, tag = 'input window, operand 4, single buffered']
    #allocation11 [shape = 'u8[16384]{0}', space=vmem, size = 0x4000, scoped, tag = 'input window, operand 5, single buffered']
    #allocation12 [shape = 's32[1]{0}', space=sflag, size = 0x4, scoped, tag = 'scoped memory for tpu_custom_call.1']
    #allocation13 [shape = 'u8[8192]{0}', space=vmem, size = 0x2000, scoped, tag = 'output window, operand 0']
    %13 = vsyncpa [#allocation3], 0
    %s14 = scalar_lea.sflag [#allocation3], 1
    %15 = vsyncpa %s14, 0
    %16 = vsyncpa [#allocation6], 0
    %s17 = scalar_lea.sflag [#allocation6], 1
    %18 = vsyncpa %s17, 0
    %19 = vsyncpa [#allocation9], 0
    %s20 = scalar_lea.sflag [#allocation9], 1
    %21 = vsyncpa %s20, 0
    %22 = vsyncpa [#allocation12], 0
    %23 = vsyncpa [#allocation4], 0
    %s24 = scalar_lea.sflag [#allocation4], 1
    %25 = vsyncpa %s24, 0
    loop: start=0, step=1, limit=6
    $region2: #{tpu_custom_call.1} parent=1 // loop_pre_header
      _
    $region3: #{tpu_custom_call.1} parent=1 // loop_header
      %s27 = sphi 0, %s31
      %p28 = scmp.ge.s32.totalorder %s27, 6
      %s37 = sphi 0, %s39
      %s40 = sphi 0, %s37
      %s41 = sphi 0, %s40
      %s57 = sphi 0, %s41
      %s63 = sphi 0, %s65
      %s66 = sphi 0, %s63
      %s67 = sphi 0, %s66
      %s83 = sphi 0, %s67
      %s89 = sphi 0, %s91
      %s92 = sphi 0, %s89
      %s93 = sphi 0, %s92
      %s109 = sphi 0, %s93
      %s115 = sphi 0, %s117
      %s118 = sphi 0, %s115
      %s119 = sphi 0, %s118
      %s135 = sphi 0, %s119
      %s139 = sphi 0, %s139
      %s141 = sphi 0, %s139
      %s142 = sphi 0, %s141
      %s156 = sphi 0, %s142
      %s160 = sphi 0, %s160
      %s162 = sphi 0, %s160
      %s163 = sphi 0, %s162
      %s177 = sphi 0, %s163
      %s183 = sphi 0, %s185
      %s186 = sphi 0, %s183
      %s187 = sphi 0, %s186
      %s203 = sphi 0, %s187
      %s209 = sphi 0, %s211
      %s212 = sphi 0, %s209
      %s213 = sphi 0, %s212
      %s229 = sphi 0, %s213
    $region4: #{tpu_custom_call.1} parent=1 // loop_header_branch
      %30 = sbr.rel (%p28) target = $region8
    $region5: #{tpu_custom_call.1} parent=1 // loop_body
      %s32 = ssub.s32 %s27, 1
      %s33 = ssub.s32 %s27, 2
      %s34 = sadd.s32 %s27, 1
      %s35 = ssub.s32 %s27, %s34
      %p36 = scmp.eq.s32.totalorder %s35, 0
      %s38 = sadd.s32 %s37, 1
      %s39 = scalar_select %p36, %s37, %s38
      %p42 = pneg %p36
      %p43 = scmp.eq.s32.totalorder %s27, 3
      %p44 = por %p42, %p43
      %p45 = scmp.ne.s32.totalorder %s37, %s40
      %p46 = scmp.eq.s32.totalorder %s27, 0
      %p47 = por %p45, %p46
      %p48 = scmp.ne.s32.totalorder %s37, %s40
      %p49 = scmp.eq.s32.totalorder %s32, 3
      %p50 = por %p48, %p49
      %p51 = scmp.ne.s32.totalorder %s40, %s41
      %p52 = scmp.eq.s32.totalorder %s32, 0
      %p53 = por %p51, %p52
      %p54 = scmp.ne.s32.totalorder %s40, %s41
      %p55 = scmp.eq.s32.totalorder %s33, 3
      %p56 = por %p54, %p55
      %p58 = scmp.ne.s32.totalorder %s41, %s57
      %p59 = scmp.eq.s32.totalorder %s33, 0
      %p60 = por %p58, %p59
      %s61 = ssub.s32 %s27, %s34
      %p62 = scmp.eq.s32.totalorder %s61, 0
      %s64 = sadd.s32 %s63, 1
      %s65 = scalar_select %p62, %s63, %s64
      %p68 = pneg %p62
      %p69 = scmp.eq.s32.totalorder %s27, 3
      %p70 = por %p68, %p69
      %p71 = scmp.ne.s32.totalorder %s63, %s66
      %p72 = scmp.eq.s32.totalorder %s27, 0
      %p73 = por %p71, %p72
      %p74 = scmp.ne.s32.totalorder %s63, %s66
      %p75 = scmp.eq.s32.totalorder %s32, 3
      %p76 = por %p74, %p75
      %p77 = scmp.ne.s32.totalorder %s66, %s67
      %p78 = scmp.eq.s32.totalorder %s32, 0
      %p79 = por %p77, %p78
      %p80 = scmp.ne.s32.totalorder %s66, %s67
      %p81 = scmp.eq.s32.totalorder %s33, 3
      %p82 = por %p80, %p81
      %p84 = scmp.ne.s32.totalorder %s67, %s83
      %p85 = scmp.eq.s32.totalorder %s33, 0
      %p86 = por %p84, %p85
      %s87 = ssub.s32 %s27, %s34
      %p88 = scmp.eq.s32.totalorder %s87, 0
      %s90 = sadd.s32 %s89, 1
      %s91 = scalar_select %p88, %s89, %s90
      %p94 = pneg %p88
      %p95 = scmp.eq.s32.totalorder %s27, 3
      %p96 = por %p94, %p95
      %p97 = scmp.ne.s32.totalorder %s89, %s92
      %p98 = scmp.eq.s32.totalorder %s27, 0
      %p99 = por %p97, %p98
      %p100 = scmp.ne.s32.totalorder %s89, %s92
      %p101 = scmp.eq.s32.totalorder %s32, 3
      %p102 = por %p100, %p101
      %p103 = scmp.ne.s32.totalorder %s92, %s93
      %p104 = scmp.eq.s32.totalorder %s32, 0
      %p105 = por %p103, %p104
      %p106 = scmp.ne.s32.totalorder %s92, %s93
      %p107 = scmp.eq.s32.totalorder %s33, 3
      %p108 = por %p106, %p107
      %p110 = scmp.ne.s32.totalorder %s93, %s109
      %p111 = scmp.eq.s32.totalorder %s33, 0
      %p112 = por %p110, %p111
      %s113 = ssub.s32 %s27, %s34
      %p114 = scmp.eq.s32.totalorder %s113, 0
      %s116 = sadd.s32 %s115, 1
      %s117 = scalar_select %p114, %s115, %s116
      %p120 = pneg %p114
      %p121 = scmp.eq.s32.totalorder %s27, 3
      %p122 = por %p120, %p121
      %p123 = scmp.ne.s32.totalorder %s115, %s118
      %p124 = scmp.eq.s32.totalorder %s27, 0
      %p125 = por %p123, %p124
      %p126 = scmp.ne.s32.totalorder %s115, %s118
      %p127 = scmp.eq.s32.totalorder %s32, 3
      %p128 = por %p126, %p127
      %p129 = scmp.ne.s32.totalorder %s118, %s119
      %p130 = scmp.eq.s32.totalorder %s32, 0
      %p131 = por %p129, %p130
      %p132 = scmp.ne.s32.totalorder %s118, %s119
      %p133 = scmp.eq.s32.totalorder %s33, 3
      %p134 = por %p132, %p133
      %p136 = scmp.ne.s32.totalorder %s119, %s135
      %p137 = scmp.eq.s32.totalorder %s33, 0
      %p138 = por %p136, %p137
      %s140 = sadd.s32 %s139, 1
      %p143 = scmp.eq.s32.totalorder %s27, 3
      %p144 = scmp.ne.s32.totalorder %s139, %s141
      %p145 = scmp.eq.s32.totalorder %s27, 0
      %p146 = por %p144, %p145
      %p147 = scmp.ne.s32.totalorder %s139, %s141
      %p148 = scmp.eq.s32.totalorder %s32, 3
      %p149 = por %p147, %p148
      %p150 = scmp.ne.s32.totalorder %s141, %s142
      %p151 = scmp.eq.s32.totalorder %s32, 0
      %p152 = por %p150, %p151
      %p153 = scmp.ne.s32.totalorder %s141, %s142
      %p154 = scmp.eq.s32.totalorder %s33, 3
      %p155 = por %p153, %p154
      %p157 = scmp.ne.s32.totalorder %s142, %s156
      %p158 = scmp.eq.s32.totalorder %s33, 0
      %p159 = por %p157, %p158
      %s161 = sadd.s32 %s160, 1
      %p164 = scmp.eq.s32.totalorder %s27, 3
      %p165 = scmp.ne.s32.totalorder %s160, %s162
      %p166 = scmp.eq.s32.totalorder %s27, 0
      %p167 = por %p165, %p166
      %p168 = scmp.ne.s32.totalorder %s160, %s162
      %p169 = scmp.eq.s32.totalorder %s32, 3
      %p170 = por %p168, %p169
      %p171 = scmp.ne.s32.totalorder %s162, %s163
      %p172 = scmp.eq.s32.totalorder %s32, 0
      %p173 = por %p171, %p172
      %p174 = scmp.ne.s32.totalorder %s162, %s163
      %p175 = scmp.eq.s32.totalorder %s33, 3
      %p176 = por %p174, %p175
      %p178 = scmp.ne.s32.totalorder %s163, %s177
      %p179 = scmp.eq.s32.totalorder %s33, 0
      %p180 = por %p178, %p179
      %s181 = ssub.s32 %s27, %s34
      %p182 = scmp.eq.s32.totalorder %s181, 0
      %s184 = sadd.s32 %s183, 1
      %s185 = scalar_select %p182, %s183, %s184
      %p188 = pneg %p182
      %p189 = scmp.eq.s32.totalorder %s27, 3
      %p190 = por %p188, %p189
      %p191 = scmp.ne.s32.totalorder %s183, %s186
      %p192 = scmp.eq.s32.totalorder %s27, 0
      %p193 = por %p191, %p192
      %p194 = scmp.ne.s32.totalorder %s183, %s186
      %p195 = scmp.eq.s32.totalorder %s32, 3
      %p196 = por %p194, %p195
      %p197 = scmp.ne.s32.totalorder %s186, %s187
      %p198 = scmp.eq.s32.totalorder %s32, 0
      %p199 = por %p197, %p198
      %p200 = scmp.ne.s32.totalorder %s186, %s187
      %p201 = scmp.eq.s32.totalorder %s33, 3
      %p202 = por %p200, %p201
      %p204 = scmp.ne.s32.totalorder %s187, %s203
      %p205 = scmp.eq.s32.totalorder %s33, 0
      %p206 = por %p204, %p205
      %s207 = ssub.s32 %s27, %s34
      %p208 = scmp.eq.s32.totalorder %s207, 0
      %s210 = sadd.s32 %s209, 1
      %s211 = scalar_select %p208, %s209, %s210
      %p214 = pneg %p208
      %p215 = scmp.eq.s32.totalorder %s27, 3
      %p216 = por %p214, %p215
      %p217 = scmp.ne.s32.totalorder %s209, %s212
      %p218 = scmp.eq.s32.totalorder %s27, 0
      %p219 = por %p217, %p218
      %p220 = scmp.ne.s32.totalorder %s209, %s212
      %p221 = scmp.eq.s32.totalorder %s32, 3
      %p222 = por %p220, %p221
      %p223 = scmp.ne.s32.totalorder %s212, %s213
      %p224 = scmp.eq.s32.totalorder %s32, 0
      %p225 = por %p223, %p224
      %p226 = scmp.ne.s32.totalorder %s212, %s213
      %p227 = scmp.eq.s32.totalorder %s33, 3
      %p228 = por %p226, %p227
      %p230 = scmp.ne.s32.totalorder %s213, %s229
      %p231 = scmp.eq.s32.totalorder %s33, 0
      %p232 = por %p230, %p231
      %p233 = scmp.le.s32.totalorder 1, %s27
      %p234 = scmp.lt.s32.totalorder %s27, 5
      %p235 = pnand %p233, %p234
      %p236 = pneg %p235
      // Predicated region
      $region9: #{tpu_custom_call.1} parent=5 // pred_check
        _
      $region10: #{tpu_custom_call.1} parent=5 // pred_check_branch
        %238 = sbr.rel (%p235) target = $region12
      $region11: #{tpu_custom_call.1} parent=5 // pred_region
        %s239 = ssub.s32 %s27, 1
        // Predicated region
        $region13: #{tpu_custom_call.1} parent=11 // pred_check
          %p240 = pneg %p152
        $region14: #{tpu_custom_call.1} parent=11 // pred_check_branch
          %242 = sbr.rel (%p240) target = $region16
        $region15: #{tpu_custom_call.1} parent=11 // pred_region
          %244 = vsyncadd [#allocation9], 0
          %s245 = sshll.u32 %s4, 4
          %s246 = int_to_ptr.hbm [resolvable:$true] %s245
          %s247 = sshll.u32 [#allocation10], 4
          %s248 = int_to_ptr.vmem [resolvable:$true] %s247
          %253 = dma.hbm_to_vmem [thread:$0]  %s246, 512, %s248, [#allocation9], 128, 128, 8
        $region16: #{tpu_custom_call.1} parent=11 // pred_fallthru
          _
        // Predicated region
        $region17: #{tpu_custom_call.1} parent=11 // pred_check
          %p254 = pneg %p173
        $region18: #{tpu_custom_call.1} parent=11 // pred_check_branch
          %256 = sbr.rel (%p254) target = $region20
        $region19: #{tpu_custom_call.1} parent=11 // pred_region
          %258 = vsyncadd [#allocation12], 0
          %s259 = sshll.u32 %s5, 4
          %s260 = int_to_ptr.hbm [resolvable:$true] %s259
          %s261 = sshll.u32 [#allocation11], 4
          %s262 = int_to_ptr.vmem [resolvable:$true] %s261
          %267 = dma.hbm_to_vmem [thread:$0]  %s260, 512, %s262, [#allocation12], 128, 128, 8
        $region20: #{tpu_custom_call.1} parent=11 // pred_fallthru
          _
      $region12: #{tpu_custom_call.1} parent=5 // pred_fallthru
        _
      %p268 = scmp.lt.s32.totalorder %s27, 4
      // Predicated region
      $region21: #{tpu_custom_call.1} parent=5 // pred_check
        %p269 = pneg %p268
      $region22: #{tpu_custom_call.1} parent=5 // pred_check_branch
        %271 = sbr.rel (%p269) target = $region24
      $region23: #{tpu_custom_call.1} parent=5 // pred_region
        // Predicated region
        $region25: #{tpu_custom_call.1} parent=23 // pred_check
          %p272 = pneg %p47
        $region26: #{tpu_custom_call.1} parent=23 // pred_check_branch
          %274 = sbr.rel (%p272) target = $region28
        $region27: #{tpu_custom_call.1} parent=23 // pred_region
          %s275 = sand.u32 %s37, 1
          %s276 = scalar_lea.sflag [#allocation3], %s275
          %s277 = sand.u32 %s37, 1
          %s278 = smul.addr %s277, 2
          %s279 = scalar_lea.vmem [#allocation2], %s278
          %s280 = smul.u32 2, %s27
          %282 = vsyncadd %s276, 0
          %s283 = scalar_lea.hbm %s0, %s280
          %s284 = sshll.u32 %s283, 4
          %s285 = int_to_ptr.hbm [resolvable:$true] %s284
          %s286 = sshll.u32 %s279, 4
          %s287 = int_to_ptr.vmem [resolvable:$true] %s286
          %292 = dma.hbm_to_vmem [thread:$0]  %s285, 32, %s287, %s276, 16, 16, 1
        $region28: #{tpu_custom_call.1} parent=23 // pred_fallthru
          _
        // Predicated region
        $region29: #{tpu_custom_call.1} parent=23 // pred_check
          %p293 = pneg %p73
        $region30: #{tpu_custom_call.1} parent=23 // pred_check_branch
          %295 = sbr.rel (%p293) target = $region32
        $region31: #{tpu_custom_call.1} parent=23 // pred_region
          %s296 = sand.u32 %s27, 1
          %s297 = scalar_lea.sflag [#allocation6], %s296
          %s298 = sand.u32 %s63, 1
          %s299 = smul.addr %s298, 8
          %s300 = scalar_lea.vmem [#allocation5], %s299
          %s301 = smul.u32 2, %s27
          %303 = vsyncadd %s297, 0
          %s304 = smul.addr %s301, 4
          %s305 = scalar_lea.hbm %s1, %s304
          %s306 = sshll.u32 %s305, 4
          %s307 = int_to_ptr.hbm [resolvable:$true] %s306
          %s308 = sshll.u32 %s300, 4
          %s309 = int_to_ptr.vmem [resolvable:$true] %s308
          %314 = dma.hbm_to_vmem [thread:$0]  %s307, 128, %s309, %s297, 64, 64, 4
        $region32: #{tpu_custom_call.1} parent=23 // pred_fallthru
          _
        // Predicated region
        $region33: #{tpu_custom_call.1} parent=23 // pred_check
          %p315 = pneg %p99
        $region34: #{tpu_custom_call.1} parent=23 // pred_check_branch
          %317 = sbr.rel (%p315) target = $region36
        $region35: #{tpu_custom_call.1} parent=23 // pred_region
          %s318 = sand.u32 %s27, 1
          %s319 = scalar_lea.sflag [#allocation6], %s318
          %s320 = sand.u32 %s89, 1
          %s321 = smul.addr %s320, 64
          %s322 = scalar_lea.vmem [#allocation7], %s321
          %s323 = smul.u32 2, %s27
          %325 = vsyncadd %s319, 0
          %s326 = smul.addr %s323, 4
          %s327 = smul.addr %s326, 8
          %s328 = scalar_lea.hbm %s2, %s327
          %s329 = sshll.u32 %s328, 4
          %s330 = int_to_ptr.hbm [resolvable:$true] %s329
          %s331 = sshll.u32 %s322, 4
          %s332 = int_to_ptr.vmem [resolvable:$true] %s331
          %337 = dma.hbm_to_vmem [thread:$0]  %s330, 1024, %s332, %s319, 128, 128, 8
        $region36: #{tpu_custom_call.1} parent=23 // pred_fallthru
          _
        // Predicated region
        $region37: #{tpu_custom_call.1} parent=23 // pred_check
          %p338 = pneg %p125
        $region38: #{tpu_custom_call.1} parent=23 // pred_check_branch
          %340 = sbr.rel (%p338) target = $region40
        $region39: #{tpu_custom_call.1} parent=23 // pred_region
          %s341 = sand.u32 %s27, 1
          %s342 = scalar_lea.sflag [#allocation9], %s341
          %s343 = sand.u32 %s115, 1
          %s344 = smul.addr %s343, 8
          %s345 = scalar_lea.vmem [#allocation8], %s344
          %s346 = smul.u32 2, %s27
          %348 = vsyncadd %s342, 0
          %s349 = smul.addr %s346, 4
          %s350 = scalar_lea.hbm %s3, %s349
          %s351 = sshll.u32 %s350, 4
          %s352 = int_to_ptr.hbm [resolvable:$true] %s351
          %s353 = sshll.u32 %s345, 4
          %s354 = int_to_ptr.vmem [resolvable:$true] %s353
          %359 = dma.hbm_to_vmem [thread:$0]  %s352, 128, %s354, %s342, 64, 64, 4
        $region40: #{tpu_custom_call.1} parent=23 // pred_fallthru
          _
      $region24: #{tpu_custom_call.1} parent=5 // pred_fallthru
        _
      %p360 = scmp.le.s32.totalorder 1, %s27
      %p361 = scmp.lt.s32.totalorder %s27, 5
      %p362 = pnand %p360, %p361
      %p363 = pneg %p362
      // Predicated region
      $region41: #{tpu_custom_call.1} parent=5 // pred_check
        _
      $region42: #{tpu_custom_call.1} parent=5 // pred_check_branch
        %365 = sbr.rel (%p362) target = $region44
      $region43: #{tpu_custom_call.1} parent=5 // pred_region
        %s366 = ssub.s32 %s27, 1
        %s367 = sand.u32 %s40, 1
        %s368 = scalar_lea.sflag [#allocation3], %s367
        %s369 = sand.u32 %s40, 1
        %s370 = smul.addr %s369, 2
        %s371 = scalar_lea.vmem [#allocation2], %s370
        // Predicated region
        $region45: #{tpu_custom_call.1} parent=43 // pred_check
          %p372 = pneg %p53
        $region46: #{tpu_custom_call.1} parent=43 // pred_check_branch
          %374 = sbr.rel (%p372) target = $region48
        $region47: #{tpu_custom_call.1} parent=43 // pred_region
          %376 = dma.done %s368, 32
        $region48: #{tpu_custom_call.1} parent=43 // pred_fallthru
          _
        %s377 = sand.u32 %s32, 1
        %s378 = scalar_lea.sflag [#allocation6], %s377
        %s379 = sand.u32 %s66, 1
        %s380 = smul.addr %s379, 8
        %s381 = scalar_lea.vmem [#allocation5], %s380
        // Predicated region
        $region49: #{tpu_custom_call.1} parent=43 // pred_check
          %p382 = pneg %p79
        $region50: #{tpu_custom_call.1} parent=43 // pred_check_branch
          %384 = sbr.rel (%p382) target = $region52
        $region51: #{tpu_custom_call.1} parent=43 // pred_region
          %386 = dma.done %s378, 128
        $region52: #{tpu_custom_call.1} parent=43 // pred_fallthru
          _
        %s387 = sand.u32 %s32, 1
        %s388 = scalar_lea.sflag [#allocation6], %s387
        %s389 = sand.u32 %s92, 1
        %s390 = smul.addr %s389, 64
        %s391 = scalar_lea.vmem [#allocation7], %s390
        // Predicated region
        $region53: #{tpu_custom_call.1} parent=43 // pred_check
          %p392 = pneg %p105
        $region54: #{tpu_custom_call.1} parent=43 // pred_check_branch
          %394 = sbr.rel (%p392) target = $region56
        $region55: #{tpu_custom_call.1} parent=43 // pred_region
          %396 = dma.done %s388, 1024
        $region56: #{tpu_custom_call.1} parent=43 // pred_fallthru
          _
        %s397 = sand.u32 %s32, 1
        %s398 = scalar_lea.sflag [#allocation9], %s397
        %s399 = sand.u32 %s118, 1
        %s400 = smul.addr %s399, 8
        %s401 = scalar_lea.vmem [#allocation8], %s400
        // Predicated region
        $region57: #{tpu_custom_call.1} parent=43 // pred_check
          %p402 = pneg %p131
        $region58: #{tpu_custom_call.1} parent=43 // pred_check_branch
          %404 = sbr.rel (%p402) target = $region60
        $region59: #{tpu_custom_call.1} parent=43 // pred_region
          %406 = dma.done %s398, 128
        $region60: #{tpu_custom_call.1} parent=43 // pred_fallthru
          _
        // Predicated region
        $region61: #{tpu_custom_call.1} parent=43 // pred_check
          %p407 = pneg %p152
        $region62: #{tpu_custom_call.1} parent=43 // pred_check_branch
          %409 = sbr.rel (%p407) target = $region64
        $region63: #{tpu_custom_call.1} parent=43 // pred_region
          %411 = dma.done [#allocation9], 512
        $region64: #{tpu_custom_call.1} parent=43 // pred_fallthru
          _
        // Predicated region
        $region65: #{tpu_custom_call.1} parent=43 // pred_check
          %p412 = pneg %p173
        $region66: #{tpu_custom_call.1} parent=43 // pred_check_branch
          %414 = sbr.rel (%p412) target = $region68
        $region67: #{tpu_custom_call.1} parent=43 // pred_region
          %416 = dma.done [#allocation12], 512
        $region68: #{tpu_custom_call.1} parent=43 // pred_fallthru
          _
        %s417 = sand.u32 %s40, 1
        %s418 = scalar_lea.sflag [#allocation3], %s417
        %s419 = sand.u32 %s40, 1
        %s420 = smul.addr %s419, 2
        %s421 = scalar_lea.vmem [#allocation2], %s420
        %p422 = pneg %p53
        %p423 = pneg %p50
        %s424 = sand.u32 %s32, 1
        %s425 = scalar_lea.sflag [#allocation6], %s424
        %s426 = sand.u32 %s66, 1
        %s427 = smul.addr %s426, 8
        %s428 = scalar_lea.vmem [#allocation5], %s427
        %p429 = pneg %p79
        %p430 = pneg %p76
        %s431 = sand.u32 %s32, 1
        %s432 = scalar_lea.sflag [#allocation6], %s431
        %s433 = sand.u32 %s92, 1
        %s434 = smul.addr %s433, 64
        %s435 = scalar_lea.vmem [#allocation7], %s434
        %p436 = pneg %p105
        %p437 = pneg %p102
        %s438 = sand.u32 %s32, 1
        %s439 = scalar_lea.sflag [#allocation9], %s438
        %s440 = sand.u32 %s118, 1
        %s441 = smul.addr %s440, 8
        %s442 = scalar_lea.vmem [#allocation8], %s441
        %p443 = pneg %p131
        %p444 = pneg %p128
        %p445 = pneg %p152
        %p446 = pneg %p149
        %p447 = pneg %p173
        %p448 = pneg %p170
        %p449 = pneg %p199
        %p450 = pneg %p196
        %s451 = sand.u32 %s186, 1
        %s452 = scalar_lea.sflag [#allocation4], %s451
        %s453 = sand.u32 %s186, 1
        %s454 = smul.addr %s453, 8
        %s455 = scalar_lea.vmem [#allocation13], %s454
        %p456 = pneg %p225
        %p457 = pneg %p222
        %s458 = smul.u32 2, %s32
        %p459 = scmp.lt.s32.totalorder %s458, 7
        %s460 = scalar_select %p459, %s458, 7
        %s461 = scalar_lea.vmem %s7, %s460
        %s462 = smul.u32 2, %s32
        %s463 = smul.u32 2, %s32
        %s464 = smul.u32 2, %s32
        %s465 = smul.u32 2, %s32
        %s466 = smul.u32 2, %s32
        %s467 = smul.u32 2, %s32
        %p468 = scmp.lt.s32.totalorder %s467, 7
        %s469 = scalar_select %p468, %s467, 7
        %s470 = scalar_lea.vmem %s7, %s469
        %s471 = smul.u32 2, %s32
        %v472 = vld [vmem:[%s371] sm:$0x1]
        %v473 = vld [vmem:[%s371 + $0x1] sm:$0x1]
        %v474 = vld [vmem:[#allocation10] sm:$0xff]
        %v475 = vld [vmem:[#allocation10 + $0x8] sm:$0xff]
        %v476 = vld [vmem:[#allocation10 + $0x10] sm:$0xff]
        %v477 = vld [vmem:[#allocation10 + $0x18] sm:$0xff]
        %480 = vst [vmem:[#allocation1] ss:$9 sm:$0xff] %v472
        %s481 = scalar_lea.vmem [#allocation1], 1
        %482 = vst [vmem:[%s481] ss:$9 sm:$0xff] %v473
        %v483 = vld [vmem:[#allocation1] sm:$0xff]
        %vm484 = vcmask 261120
        %v485 = vsel %vm484, %v483, 0
        %487 = vmatpush.msra.mxu0 0.0
        %488 = vmatpush.msra.mxu0 0.0
        %489 = vmatpush.msra.mxu0 0.0
        %490 = vmatpush.msra.mxu0 0.0
        %491 = vmatpush.msra.mxu0 0.0
        %492 = vmatpush.msra.mxu0 0.0
        %493 = vmatpush.msra.mxu0 0.0
        %494 = vmatpush.msra.mxu0 0.0
        %495 = vmatpush.msra.mxu0 0.0
        %496 = vmatpush.msra.mxu0 0.0
        %497 = vmatpush.msra.mxu0 0.0
        %498 = vmatpush.msra.mxu0 0.0
        %499 = vmatpush.msra.mxu0 %v477
        %500 = vmatpush.msra.mxu0 %v476
        %501 = vmatpush.msra.mxu0 %v475
        %502 = vmatpush.msra.mxu0 %v474
        %503 = vmatmul.f32.gmra.mxu0 %v485
        %v504 = vpop.f32.mrf.mxu0
        %v505 = vadd.f32 0.0, %v504
        %506 = vdwg.mxu0
        %v507 = vld [vmem:[%s381] sm:$0xf]
        %v508 = vld [vmem:[%s381 + $0x4] sm:$0xf]
        %v510 = vrot.slane %v505, 1
        %v511 = vperm.slane %v505, 0
        %v512 = vperm.slane %v510, 0
        %v515 = vmul.f32 %v507, %v511
        %v516 = vmul.f32 %v508, %v512
        %vm517 = vcmask 257024
        %v518 = vsel %vm517, %v515, 0.0
        %519 = vadd.xlane.f32.xlu0 %v518
        %v520 = vpop.xlane.xlu0 %519
        %v521 = vsel %vm517, %v516, 0.0
        %522 = vadd.xlane.f32.xlu0 %v521
        %v523 = vpop.xlane.xlu0 %522
        %v526 = vlaneseq
        %v527 = vand.u32 %v526, 127
        %v528 = vperm.slane %v520, %v527
        %v529 = vperm.slane %v523, %v527
        %vm530 = vcmask 1041409
        %v531 = vsel %vm530, %v529, %v528
        %vm533 = vcmask 25600
        %v534 = vsel %vm533, %v531, -inf
        %535 = vmax.xlane.f32.xlu0 %v534
        %v536 = vpop.xlane.xlu0 %535
        %v538 = vperm.slane %v536, 0
        %v539 = vperm.slane %v536, 1
        %v542 = vsub.f32 %v520, %v538
        %v543 = vsub.f32 %v523, %v539
        %v544 = vmul.f32 %v542, 1.442695
        %v545 = vpow.pop %v544
        %v546 = vmul.f32 %v543, 1.442695
        %v547 = vpow.pop %v546
        %550 = vset.pattern.permute.xlu0 0
        %551 = vperm.xlu0 %550, %v545
        %v552 = vpop.permute.xlu0 %551
        %553 = vset.pattern.permute.xlu0 0
        %554 = vperm.xlu0 %553, %v547
        %v555 = vpop.permute.xlu0 %554
        %v556 = vperm.slane %v552, %v527
        %v557 = vperm.slane %v555, %v527
        %v558 = vsel %vm530, %v557, %v556
        %v560 = vsel %vm533, %v558, 0.0
        %561 = vadd.xlane.f32.xlu0 %v560
        %v562 = vpop.xlane.xlu0 %561
        %v563 = vrcp.pop %v562
        %v565 = vperm.slane %v563, 0
        %v566 = vperm.slane %v563, 1
        %v569 = vmul.f32 %v545, %v565
        %v570 = vmul.f32 %v547, %v566
        %v571 = vld [vmem:[#allocation11] sm:$0xff]
        %v572 = vld [vmem:[#allocation11 + $0x8] sm:$0xff]
        %v573 = vld [vmem:[#allocation11 + $0x10] sm:$0xff]
        %v574 = vld [vmem:[#allocation11 + $0x18] sm:$0xff]
        %577 = vst [vmem:[#allocation1] ss:$2 sm:$0xff] %v507
        %s578 = scalar_lea.vmem [#allocation1], 1
        %579 = vst [vmem:[%s578] ss:$2 sm:$0xff] %v508
        %v580 = vld.sshfl [vmem:[#allocation1] sm:$0xff pattern:$0x75316420]
        %v581 = vsel %vm484, %v580, 0
        %583 = vmatpush.msra.mxu0 0.0
        %584 = vmatpush.msra.mxu0 0.0
        %585 = vmatpush.msra.mxu0 0.0
        %586 = vmatpush.msra.mxu0 0.0
        %587 = vmatpush.msra.mxu0 0.0
        %588 = vmatpush.msra.mxu0 0.0
        %589 = vmatpush.msra.mxu0 0.0
        %590 = vmatpush.msra.mxu0 0.0
        %591 = vmatpush.msra.mxu0 0.0
        %592 = vmatpush.msra.mxu0 0.0
        %593 = vmatpush.msra.mxu0 0.0
        %594 = vmatpush.msra.mxu0 0.0
        %595 = vmatpush.msra.mxu0 %v574
        %596 = vmatpush.msra.mxu0 %v573
        %597 = vmatpush.msra.mxu0 %v572
        %598 = vmatpush.msra.mxu0 %v571
        %599 = vmatmul.f32.gmra.mxu0 %v581
        %v600 = vpop.f32.mrf.mxu0
        %v601 = vadd.f32 0.0, %v600
        %602 = vdwg.mxu0
        %v603 = vld [vmem:[%s391] sm:$0xff]
        %v604 = vld [vmem:[%s391 + $0x8] sm:$0xff]
        %v605 = vld [vmem:[%s391 + $0x10] sm:$0xff]
        %v606 = vld [vmem:[%s391 + $0x18] sm:$0xff]
        %v607 = vld [vmem:[%s391 + $0x20] sm:$0xff]
        %v608 = vld [vmem:[%s391 + $0x28] sm:$0xff]
        %v609 = vld [vmem:[%s391 + $0x30] sm:$0xff]
        %v610 = vld [vmem:[%s391 + $0x38] sm:$0xff]
        %v612 = vrot.slane %v601, 1
        %v613 = vrot.slane %v601, 2
        %v614 = vrot.slane %v601, 3
        %v615 = vrot.slane %v601, 4
        %v616 = vrot.slane %v601, 5
        %v617 = vrot.slane %v601, 6
        %v618 = vrot.slane %v601, 7
        %v619 = vperm.slane %v601, 0
        %v620 = vperm.slane %v612, 0
        %v621 = vperm.slane %v613, 0
        %v622 = vperm.slane %v614, 0
        %v623 = vperm.slane %v615, 0
        %v624 = vperm.slane %v616, 0
        %v625 = vperm.slane %v617, 0
        %v626 = vperm.slane %v618, 0
        %v635 = vmul.f32 %v603, %v619
        %v636 = vmul.f32 %v604, %v620
        %v637 = vmul.f32 %v605, %v621
        %v638 = vmul.f32 %v606, %v622
        %v639 = vmul.f32 %v607, %v623
        %v640 = vmul.f32 %v608, %v624
        %v641 = vmul.f32 %v609, %v625
        %v642 = vmul.f32 %v610, %v626
        %v643 = vsel %vm484, %v635, 0.0
        %644 = vadd.xlane.f32.xlu0 %v643
        %v645 = vpop.xlane.xlu0 %644
        %v646 = vsel %vm484, %v636, 0.0
        %647 = vadd.xlane.f32.xlu0 %v646
        %v648 = vpop.xlane.xlu0 %647
        %v649 = vsel %vm484, %v637, 0.0
        %650 = vadd.xlane.f32.xlu0 %v649
        %v651 = vpop.xlane.xlu0 %650
        %v652 = vsel %vm484, %v638, 0.0
        %653 = vadd.xlane.f32.xlu0 %v652
        %v654 = vpop.xlane.xlu0 %653
        %v655 = vsel %vm484, %v639, 0.0
        %656 = vadd.xlane.f32.xlu0 %v655
        %v657 = vpop.xlane.xlu0 %656
        %v658 = vsel %vm484, %v640, 0.0
        %659 = vadd.xlane.f32.xlu0 %v658
        %v660 = vpop.xlane.xlu0 %659
        %v661 = vsel %vm484, %v641, 0.0
        %662 = vadd.xlane.f32.xlu0 %v661
        %v663 = vpop.xlane.xlu0 %662
        %v664 = vsel %vm484, %v642, 0.0
        %665 = vadd.xlane.f32.xlu0 %v664
        %v666 = vpop.xlane.xlu0 %665
        %v675 = vperm.slane %v645, %v527
        %v676 = vperm.slane %v648, %v527
        %v677 = vperm.slane %v651, %v527
        %v678 = vperm.slane %v654, %v527
        %v679 = vperm.slane %v657, %v527
        %v680 = vperm.slane %v660, %v527
        %v681 = vperm.slane %v663, %v527
        %v682 = vperm.slane %v666, %v527
        %v683 = vsel %vm530, %v676, %v675
        %vm684 = vcmask 1042434
        %v685 = vsel %vm684, %v677, %v683
        %vm686 = vcmask 1043459
        %v687 = vsel %vm686, %v678, %v685
        %v688 = vsel %vm530, %v680, %v679
        %v689 = vsel %vm684, %v681, %v688
        %v690 = vsel %vm686, %v682, %v689
        %vm693 = vcmask 60416
        %v694 = vsel %vm693, %v687, -inf
        %695 = vmax.xlane.f32.xlu0 %v694
        %v696 = vpop.xlane.xlu0 %695
        %v697 = vsel %vm693, %v690, -inf
        %698 = vmax.xlane.f32.xlu0 %v697
        %v699 = vpop.xlane.xlu0 %698
        %v702 = vperm.slane %v696, 0
        %v703 = vperm.slane %v696, 1
        %v704 = vperm.slane %v696, 2
        %v705 = vperm.slane %v696, 3
        %v706 = vperm.slane %v699, 0
        %v707 = vperm.slane %v699, 1
        %v708 = vperm.slane %v699, 2
        %v709 = vperm.slane %v699, 3
        %v718 = vsub.f32 %v645, %v702
        %v719 = vsub.f32 %v648, %v703
        %v720 = vsub.f32 %v651, %v704
        %v721 = vsub.f32 %v654, %v705
        %v722 = vsub.f32 %v657, %v706
        %v723 = vsub.f32 %v660, %v707
        %v724 = vsub.f32 %v663, %v708
        %v725 = vsub.f32 %v666, %v709
        %v726 = vmul.f32 %v718, 1.442695
        %v727 = vpow.pop %v726
        %v728 = vmul.f32 %v719, 1.442695
        %v729 = vpow.pop %v728
        %v730 = vmul.f32 %v720, 1.442695
        %v731 = vpow.pop %v730
        %v732 = vmul.f32 %v721, 1.442695
        %v733 = vpow.pop %v732
        %v734 = vmul.f32 %v722, 1.442695
        %v735 = vpow.pop %v734
        %v736 = vmul.f32 %v723, 1.442695
        %v737 = vpow.pop %v736
        %v738 = vmul.f32 %v724, 1.442695
        %v739 = vpow.pop %v738
        %v740 = vmul.f32 %v725, 1.442695
        %v741 = vpow.pop %v740
        %750 = vset.pattern.permute.xlu0 0
        %751 = vperm.xlu0 %750, %v727
        %v752 = vpop.permute.xlu0 %751
        %753 = vset.pattern.permute.xlu0 0
        %754 = vperm.xlu0 %753, %v729
        %v755 = vpop.permute.xlu0 %754
        %756 = vset.pattern.permute.xlu0 0
        %757 = vperm.xlu0 %756, %v731
        %v758 = vpop.permute.xlu0 %757
        %759 = vset.pattern.permute.xlu0 0
        %760 = vperm.xlu0 %759, %v733
        %v761 = vpop.permute.xlu0 %760
        %762 = vset.pattern.permute.xlu0 0
        %763 = vperm.xlu0 %762, %v735
        %v764 = vpop.permute.xlu0 %763
        %765 = vset.pattern.permute.xlu0 0
        %766 = vperm.xlu0 %765, %v737
        %v767 = vpop.permute.xlu0 %766
        %768 = vset.pattern.permute.xlu0 0
        %769 = vperm.xlu0 %768, %v739
        %v770 = vpop.permute.xlu0 %769
        %771 = vset.pattern.permute.xlu0 0
        %772 = vperm.xlu0 %771, %v741
        %v773 = vpop.permute.xlu0 %772
        %v774 = vperm.slane %v752, %v527
        %v775 = vperm.slane %v755, %v527
        %v776 = vperm.slane %v758, %v527
        %v777 = vperm.slane %v761, %v527
        %v778 = vperm.slane %v764, %v527
        %v779 = vperm.slane %v767, %v527
        %v780 = vperm.slane %v770, %v527
        %v781 = vperm.slane %v773, %v527
        %v782 = vsel %vm530, %v775, %v774
        %v783 = vsel %vm684, %v776, %v782
        %v784 = vsel %vm686, %v777, %v783
        %v785 = vsel %vm530, %v779, %v778
        %v786 = vsel %vm684, %v780, %v785
        %v787 = vsel %vm686, %v781, %v786
        %v790 = vsel %vm693, %v784, 0.0
        %791 = vadd.xlane.f32.xlu0 %v790
        %v792 = vpop.xlane.xlu0 %791
        %v793 = vsel %vm693, %v787, 0.0
        %794 = vadd.xlane.f32.xlu0 %v793
        %v795 = vpop.xlane.xlu0 %794
        %v796 = vrcp.pop %v792
        %v797 = vrcp.pop %v795
        %v800 = vperm.slane %v796, 0
        %v801 = vperm.slane %v796, 1
        %v802 = vperm.slane %v796, 2
        %v803 = vperm.slane %v796, 3
        %v804 = vperm.slane %v797, 0
        %v805 = vperm.slane %v797, 1
        %v806 = vperm.slane %v797, 2
        %v807 = vperm.slane %v797, 3
        %v816 = vmul.f32 %v727, %v800
        %v817 = vmul.f32 %v729, %v801
        %v818 = vmul.f32 %v731, %v802
        %v819 = vmul.f32 %v733, %v803
        %v820 = vmul.f32 %v735, %v804
        %v821 = vmul.f32 %v737, %v805
        %v822 = vmul.f32 %v739, %v806
        %v823 = vmul.f32 %v741, %v807
        %825 = vset.pattern.permute.xlu0 0
        %826 = vperm.xlu0 %825, %v569
        %v827 = vpop.permute.xlu0 %826
        %830 = vset.pattern.permute.xlu0 0
        %831 = vperm.xlu0 %830, %v570
        %v832 = vpop.permute.xlu0 %831
        %842 = vset.pattern.permute.xlu0 0
        %843 = vperm.xlu0 %842, %v816
        %v844 = vpop.permute.xlu0 %843
        %845 = vset.pattern.permute.xlu0 0
        %846 = vperm.xlu0 %845, %v817
        %v847 = vpop.permute.xlu0 %846
        %848 = vset.pattern.permute.xlu0 0
        %849 = vperm.xlu0 %848, %v818
        %v850 = vpop.permute.xlu0 %849
        %851 = vset.pattern.permute.xlu0 0
        %852 = vperm.xlu0 %851, %v819
        %v853 = vpop.permute.xlu0 %852
        %854 = vset.pattern.permute.xlu0 0
        %855 = vperm.xlu0 %854, %v820
        %v856 = vpop.permute.xlu0 %855
        %857 = vset.pattern.permute.xlu0 0
        %858 = vperm.xlu0 %857, %v821
        %v859 = vpop.permute.xlu0 %858
        %860 = vset.pattern.permute.xlu0 0
        %861 = vperm.xlu0 %860, %v822
        %v862 = vpop.permute.xlu0 %861
        %863 = vset.pattern.permute.xlu0 0
        %864 = vperm.xlu0 %863, %v823
        %v865 = vpop.permute.xlu0 %864
        %v866 = vperm.slane %v844, %v527
        %v867 = vperm.slane %v847, %v527
        %v868 = vperm.slane %v850, %v527
        %v869 = vperm.slane %v853, %v527
        %v870 = vperm.slane %v856, %v527
        %v871 = vperm.slane %v859, %v527
        %v872 = vperm.slane %v862, %v527
        %v873 = vperm.slane %v865, %v527
        %v874 = vsel %vm530, %v867, %v866
        %v875 = vsel %vm684, %v868, %v874
        %v876 = vsel %vm686, %v869, %v875
        %v877 = vsel %vm530, %v871, %v870
        %v878 = vsel %vm684, %v872, %v877
        %v879 = vsel %vm686, %v873, %v878
        %v882 = vmul.f32 %v827, %v876
        %v883 = vmul.f32 %v832, %v879
        %v884 = vld [vmem:[%s401] sm:$0xf]
        %v885 = vld [vmem:[%s401 + $0x4] sm:$0xf]
        %vm886 = vcmp.ne.s32.totalorder %v884, 0
        %vm887 = vcmp.ne.s32.totalorder %v885, 0
        %v888 = vsel %vm886, -inf, %v882
        %v889 = vsel %vm887, -inf, %v883
        %890 = vst.msk [vmem:[%s455] sm:$0xf] %vm693, %v888
        %891 = vst.msk [vmem:[%s455 + $0x4] sm:$0xf] %vm693, %v889
        %v892 = vsel %vm693, %v888, -inf
        %893 = vmax.xlane.f32.xlu0 %v892
        %v894 = vpop.xlane.xlu0 %893
        %v895 = vsel %vm693, %v889, -inf
        %896 = vmax.xlane.f32.xlu0 %v895
        %v897 = vpop.xlane.xlu0 %896
        %vm898 = vcmask 1043456
        %v899 = vsel %vm898, %v894, -inf
        %v900 = vrot.slane %v899, 4
        %v901 = vmax.f32 %v899, %v900
        %v902 = vrot.slane %v901, 2
        %v903 = vmax.f32 %v901, %v902
        %v904 = vrot.slane %v903, 1
        %v905 = vmax.f32 %v903, %v904
        %v906 = vsel %vm898, %v897, -inf
        %v907 = vrot.slane %v906, 4
        %v908 = vmax.f32 %v906, %v907
        %v909 = vrot.slane %v908, 2
        %v910 = vmax.f32 %v908, %v909
        %v911 = vrot.slane %v910, 1
        %v912 = vmax.f32 %v910, %v911
        %v913 = vlaneseq
        %v914 = vshrl.u32 %v913, 7
        %v915 = vmul.u32 %v914, 8
        %v916 = vadd.s32 %v915, %v527
        %v917 = vcvt.s32.f32 %v916
        %vm918 = vcmp.eq.f32.partialorder %v888, %v905
        %vm919 = vcmp.eq.f32.partialorder %v889, %v912
        %v920 = vsel %vm918, %v917, 32.0
        %v921 = vsel %vm919, %v917, 32.0
        %v922 = vsel %vm693, %v920, inf
        %923 = vmin.xlane.f32.xlu0 %v922
        %v924 = vpop.xlane.xlu0 %923
        %v925 = vsel %vm693, %v921, inf
        %926 = vmin.xlane.f32.xlu0 %v925
        %v927 = vpop.xlane.xlu0 %926
        %v928 = vsel %vm898, %v924, inf
        %v929 = vrot.slane %v928, 4
        %v930 = vmin.f32 %v928, %v929
        %v931 = vrot.slane %v930, 2
        %v932 = vmin.f32 %v930, %v931
        %v933 = vrot.slane %v932, 1
        %v934 = vmin.f32 %v932, %v933
        %v935 = vsel %vm898, %v927, inf
        %v936 = vrot.slane %v935, 4
        %v937 = vmin.f32 %v935, %v936
        %v938 = vrot.slane %v937, 2
        %v939 = vmin.f32 %v937, %v938
        %v940 = vrot.slane %v939, 1
        %v941 = vmin.f32 %v939, %v940
        %v942 = vcvt.f32.s32.to.zero.pseudo %v934
        %v943 = vcvt.f32.s32.to.zero.pseudo %v941
        %vm944 = vcmask 0
        %945 = vst.msk [vmem:[%s470] sm:$0x1] %vm944, %v942
        %946 = vst.msk [vmem:[%s470 + $0x1] sm:$0x1] %vm944, %v943
        %s947 = sand.u32 %s186, 1
        %s948 = scalar_lea.sflag [#allocation4], %s947
        %s949 = sand.u32 %s186, 1
        %s950 = smul.addr %s949, 8
        %s951 = scalar_lea.vmem [#allocation13], %s950
        %s952 = smul.u32 2, %s32
        %p953 = scmp.lt.s32.totalorder %s952, 7
        %s954 = scalar_select %p953, %s952, 7
        %s955 = scalar_lea.vmem %s7, %s954
        // Predicated region
        $region69: #{tpu_custom_call.1} parent=43 // pred_check
          %p956 = pneg %p196
        $region70: #{tpu_custom_call.1} parent=43 // pred_check_branch
          %958 = sbr.rel (%p956) target = $region72
        $region71: #{tpu_custom_call.1} parent=43 // pred_region
          %s959 = smul.u32 2, %s32
          %961 = vsyncadd %s948, 0
          %s962 = smul.addr %s959, 4
          %s963 = scalar_lea.hbm %s6, %s962
          %s964 = sshll.u32 %s951, 4
          %s965 = int_to_ptr.vmem [resolvable:$true] %s964
          %s966 = sshll.u32 %s963, 4
          %s967 = int_to_ptr.hbm [resolvable:$true] %s966
          %972 = dma.vmem_to_hbm [thread:$0]  %s965, 128, %s967, %s948, 64, 64, 4
        $region72: #{tpu_custom_call.1} parent=43 // pred_fallthru
          _
        // Predicated region
        $region73: #{tpu_custom_call.1} parent=43 // pred_check
          %p973 = pneg %p222
        $region74: #{tpu_custom_call.1} parent=43 // pred_check_branch
          %975 = sbr.rel (%p973) target = $region76
        $region75: #{tpu_custom_call.1} parent=43 // pred_region
          %s976 = smul.u32 2, %s32
        $region76: #{tpu_custom_call.1} parent=43 // pred_fallthru
          _
      $region44: #{tpu_custom_call.1} parent=5 // pred_fallthru
        _
      %p977 = scmp.le.s32.totalorder 2, %s27
      // Predicated region
      $region77: #{tpu_custom_call.1} parent=5 // pred_check
        %p978 = pneg %p977
      $region78: #{tpu_custom_call.1} parent=5 // pred_check_branch
        %980 = sbr.rel (%p978) target = $region80
      $region79: #{tpu_custom_call.1} parent=5 // pred_region
        %s981 = ssub.s32 %s27, 2
        // Predicated region
        $region81: #{tpu_custom_call.1} parent=79 // pred_check
          %p982 = pneg %p202
        $region82: #{tpu_custom_call.1} parent=79 // pred_check_branch
          %984 = sbr.rel (%p982) target = $region84
        $region83: #{tpu_custom_call.1} parent=79 // pred_region
          %s985 = sand.u32 %s187, 1
          %s986 = scalar_lea.sflag [#allocation4], %s985
          %s987 = sand.u32 %s187, 1
          %s988 = smul.addr %s987, 8
          %s989 = scalar_lea.vmem [#allocation13], %s988
          %991 = dma.done %s986, 128
        $region84: #{tpu_custom_call.1} parent=79 // pred_fallthru
          _
        // Predicated region
        $region85: #{tpu_custom_call.1} parent=79 // pred_check
          %p992 = pneg %p228
        $region86: #{tpu_custom_call.1} parent=79 // pred_check_branch
          %994 = sbr.rel (%p992) target = $region88
        $region87: #{tpu_custom_call.1} parent=79 // pred_region
          %s995 = smul.u32 2, %s33
          %p996 = scmp.lt.s32.totalorder %s995, 7
          %s997 = scalar_select %p996, %s995, 7
          %s998 = scalar_lea.vmem %s7, %s997
        $region88: #{tpu_custom_call.1} parent=79 // pred_fallthru
          _
      $region80: #{tpu_custom_call.1} parent=5 // pred_fallthru
        _
    $region6: #{tpu_custom_call.1} parent=1 // loop_footer
      %s31 = sadd.s32 1, %s27
    $region7: #{tpu_custom_call.1} parent=1 // loop_footer_branch
      %26 = sbr.rel target = $region3
    $region8: #{tpu_custom_call.1} parent=1 // loop_exit
      _
    %999 = vsyncpa [#allocation3], 1
    %s1000 = scalar_lea.sflag [#allocation3], 1
    %1001 = vsyncpa %s1000, 1
    %1002 = vsyncpa [#allocation6], 1
    %s1003 = scalar_lea.sflag [#allocation6], 1
    %1004 = vsyncpa %s1003, 1
    %1005 = vsyncpa [#allocation9], 1
    %s1006 = scalar_lea.sflag [#allocation9], 1
    %1007 = vsyncpa %s1006, 1
    %1008 = vsyncpa [#allocation12], 1
    %1009 = vsyncpa [#allocation4], 1
    %s1010 = scalar_lea.sflag [#allocation4], 1
    %1011 = vsyncpa %s1010, 1

</llo_original>
